<compile_context>
chip_gen: v6e
topology: v6e:2x2x1
jax: 0.10.0
libtpu: 0.0.40
codegen_flags: <defaults>
</compile_context>

<pallas_src>
import jax
import jax.numpy as jnp
import numpy as np
from jax.experimental import pallas as pl
from jax.experimental.pallas import tpu as pltpu

BN_EPS = 1e-5


def _bn_train(h, gamma, beta):
    """BatchNorm1d, training mode: batch stats over axis 0, biased variance.

    Applied as a single fused h*scale + shift (scale/shift computed once per
    feature), which keeps the per-element VPU work to one FMA pattern.
    """
    mean = jnp.mean(h, axis=0, keepdims=True)
    var = jnp.mean(jnp.square(h - mean), axis=0, keepdims=True)
    scale = gamma * jax.lax.rsqrt(var + BN_EPS)
    shift = beta - mean * scale
    return h * scale + shift


def decoder_kernel(
    # --- inputs living fully in VMEM (small) ---
    z_ref,
    w_l_ref, b_l_ref, g_l_ref, be_l_ref,   # fc_dec_l + fc_bn_dec_l
    b_2_ref, g_2_ref, be_2_ref,            # fc_dec2 bias + fc_bn_dec2
    b_1_ref,                               # fc_dec1 bias
    # --- large weights left in HBM, DMA'd manually (overlap with compute) ---
    w_2_hbm, w_1_hbm,
    # --- output ---
    out_ref,
    # --- scratch ---
    w_2_vmem, w_1_vmem, sem,
):
    # Kick off the weight DMAs for layers 2 and 1 immediately; they overlap
    # with the layer-l matmul + BN (and, for w_1, layer-2 as well).
    cp2 = pltpu.make_async_copy(w_2_hbm, w_2_vmem, sem.at[0])
    cp1 = pltpu.make_async_copy(w_1_hbm, w_1_vmem, sem.at[1])
    cp2.start()
    cp1.start()

    # --- layer "l": Linear -> ReLU -> BatchNorm (BN AFTER ReLU, as in ref)
    z16 = z_ref[...].astype(jnp.bfloat16)
    h = jnp.dot(z16, w_l_ref[...], preferred_element_type=jnp.float32)
    h = h + b_l_ref[...]
    h = jnp.maximum(h, 0.0)
    h = _bn_train(h, g_l_ref[...], be_l_ref[...])

    # --- layer "2": Linear -> ReLU -> BatchNorm
    cp2.wait()
    h = jnp.dot(h.astype(jnp.bfloat16), w_2_vmem[...],
                preferred_element_type=jnp.float32)
    h = h + b_2_ref[...]
    h = jnp.maximum(h, 0.0)
    h = _bn_train(h, g_2_ref[...], be_2_ref[...])

    # --- layer "1": Linear -> sigmoid
    cp1.wait()
    h = jnp.dot(h.astype(jnp.bfloat16), w_1_vmem[...],
                preferred_element_type=jnp.float32)
    h = h + b_1_ref[...]
    out_ref[...] = jax.nn.sigmoid(h).astype(out_ref.dtype)


_VMEM_SPEC = pl.BlockSpec(memory_space=pltpu.MemorySpace.VMEM)
_ANY_SPEC = pl.BlockSpec(memory_space=pl.ANY)


@jax.jit
def decoder_decode(params, z):
    """Runs Decoder.decode(z) as one fused Pallas call (gridless)."""
    B = z.shape[0]
    d_l, d_2 = params["w_2"].shape            # (n_in*f^2, n_in*f)
    d_1 = params["w_1"].shape[1]              # n_in
    # TODO(synk): if B is ever not a multiple of 8, pad rows outside the kernel
    # and mask the BN mean/var with the true row count.

    args = (
        z,
        params["w_l"], params["b_l"], params["g_l"], params["be_l"],
        params["b_2"], params["g_2"], params["be_2"],
        params["b_1"],
        params["w_2"], params["w_1"],
    )
    in_specs = [_VMEM_SPEC] * 9 + [_ANY_SPEC, _ANY_SPEC]

    return pl.pallas_call(
        decoder_kernel,
        out_shape=jax.ShapeDtypeStruct((B, d_1), jnp.float32),
        in_specs=in_specs,
        out_specs=_VMEM_SPEC,
        scratch_shapes=[
            pltpu.VMEM((d_l, d_2), jnp.bfloat16),   # w_2 landing buffer
            pltpu.VMEM((d_2, d_1), jnp.bfloat16),   # w_1 landing buffer
            pltpu.SemaphoreType.DMA((2,)),
        ],
    )(*args)


def decoder_forward(params, inputs):
    """Mirrors Decoder.forward: input = (z, mu, logvar) -> (decoded, z, mu, logvar)."""
    z, mu, logvar = inputs
    decoded = decoder_decode(params, z)
    return decoded, z, mu, logvar


def init_decoder_params(key, *, n_input_layer, n_latent_layer, factor=0.5,
                        n_reduction_layers=2):
    assert n_reduction_layers == 2, "kernel is specialized for the default 2 reduction layers"
    d_l = int(n_input_layer * factor ** n_reduction_layers)   # fc_dec_l out
    d_2 = int(n_input_layer * factor)                          # fc_dec2 out
    d_1 = int(n_input_layer)                                   # fc_dec1 out

    ks = jax.random.split(key, 8)

    def lin(k, d_in, d_out):
        kw, kb = jax.random.split(k)
        bound = 1.0 / np.sqrt(d_in)
        w = jax.random.uniform(kw, (d_in, d_out), jnp.float32, -bound, bound)
        b = jax.random.uniform(kb, (1, d_out), jnp.float32, -bound, bound)
        # weights feed the MXU in bf16 (f32 accumulation); biases stay f32
        return w.astype(jnp.bfloat16), b

    w_l, b_l = lin(ks[0], n_latent_layer, d_l)
    w_2, b_2 = lin(ks[1], d_l, d_2)
    w_1, b_1 = lin(ks[2], d_2, d_1)

    # BatchNorm affine params (PyTorch default init: gamma=1, beta=0; perturb
    # slightly but deterministically so the affine path is exercised).
    g_l = 1.0 + 0.1 * jax.random.normal(ks[3], (1, d_l), jnp.float32)
    be_l = 0.1 * jax.random.normal(ks[4], (1, d_l), jnp.float32)
    g_2 = 1.0 + 0.1 * jax.random.normal(ks[5], (1, d_2), jnp.float32)
    be_2 = 0.1 * jax.random.normal(ks[6], (1, d_2), jnp.float32)

    params = dict(
        w_l=w_l, b_l=b_l, g_l=g_l, be_l=be_l,
        w_2=w_2, b_2=b_2, g_2=g_2, be_2=be_2,
        w_1=w_1, b_1=b_1,
    )
    return params, d_1


def decoder_reference(params, z):
    """Pure-JAX reference of Decoder.decode (training-mode BN, same bf16 matmul
    inputs / f32 accumulation as the kernel)."""
    def dot(x, w):
        return jnp.dot(x.astype(jnp.bfloat16), w,
                       preferred_element_type=jnp.float32)

    h = jnp.maximum(dot(z, params["w_l"]) + params["b_l"], 0.0)
    h = _bn_train(h, params["g_l"], params["be_l"])
    h = jnp.maximum(dot(h, params["w_2"]) + params["b_2"], 0.0)
    h = _bn_train(h, params["g_2"], params["be_2"])
    return jax.nn.sigmoid(dot(h, params["w_1"]) + params["b_1"])


if __name__ == "__main__":
    # Small, TPU-friendly shapes consistent with the module's constructor:
    # Decoder(factor=0.5, n_input_layer=512, n_latent_layer=128, n_reduction_layers=2)
    # -> fc_dec_l: 128->128, fc_dec2: 128->256, fc_dec1: 256->512
    n_input_layer = 512
    n_latent_layer = 128
    batch = 8

    key = jax.random.PRNGKey(0)
    k_params, k_z, k_mu, k_lv = jax.random.split(key, 4)

    params, n_out = init_decoder_params(
        k_params, n_input_layer=n_input_layer, n_latent_layer=n_latent_layer)

    z = jax.random.normal(k_z, (batch, n_latent_layer), jnp.float32)
    mu = jax.random.normal(k_mu, (batch, n_latent_layer), jnp.float32)
    logvar = jax.random.normal(k_lv, (batch, n_latent_layer), jnp.float32)

    decoded, z_out, mu_out, logvar_out = decoder_forward(params, (z, mu, logvar))
    jax.block_until_ready(decoded)

    # Numerical check against a pure-JAX reference doing the same bf16-weight /
    # f32-accumulate math.
    ref = decoder_reference(params, z)
    np.testing.assert_allclose(np.asarray(decoded), np.asarray(ref),
                               rtol=1e-4, atol=1e-4)
    assert decoded.shape == (batch, n_input_layer)
    assert z_out.shape == mu_out.shape == logvar_out.shape == (batch, n_latent_layer)

    print("KERNEL_OK")
</pallas_src>

<mosaic_0001>
module attributes {stable_mosaic.version = 11 : i64} {
  func.func @decoder_kernel(%arg0: memref<8x128xf32, #tpu.memory_space<vmem>>, %arg1: memref<128x128xbf16, #tpu.memory_space<vmem>>, %arg2: memref<1x128xf32, #tpu.memory_space<vmem>>, %arg3: memref<1x128xf32, #tpu.memory_space<vmem>>, %arg4: memref<1x128xf32, #tpu.memory_space<vmem>>, %arg5: memref<1x256xf32, #tpu.memory_space<vmem>>, %arg6: memref<1x256xf32, #tpu.memory_space<vmem>>, %arg7: memref<1x256xf32, #tpu.memory_space<vmem>>, %arg8: memref<1x512xf32, #tpu.memory_space<vmem>>, %arg9: memref<128x256xbf16, #tpu.memory_space<any>>, %arg10: memref<256x512xbf16, #tpu.memory_space<any>>, %arg11: memref<8x512xf32, #tpu.memory_space<vmem>>, %arg12: memref<128x256xbf16, #tpu.memory_space<vmem>>, %arg13: memref<256x512xbf16, #tpu.memory_space<vmem>>, %arg14: memref<2x!tpu.dma_semaphore, #tpu.memory_space<semaphore_mem>>) attributes {dimension_semantics = [], scalar_prefetch = 0 : i64, scratch_operands = 3 : i64, tpu.core_type = #tpu.core_type<tc>} {
    %c0_i32 = arith.constant 0 : i32
    %0 = tpu.memref_slice %arg14[%c0_i32] : memref<2x!tpu.dma_semaphore, #tpu.memory_space<semaphore_mem>> -> memref<1x!tpu.dma_semaphore, #tpu.memory_space<semaphore_mem>>
    %1 = tpu.memref_squeeze %0 : memref<1x!tpu.dma_semaphore, #tpu.memory_space<semaphore_mem>> -> memref<!tpu.dma_semaphore, #tpu.memory_space<semaphore_mem>>
    tpu.enqueue_dma source(%arg9 : memref<128x256xbf16, #tpu.memory_space<any>>) target(%arg12 : memref<128x256xbf16, #tpu.memory_space<vmem>>) target_semaphore(%1 : memref<!tpu.dma_semaphore, #tpu.memory_space<semaphore_mem>>)
    %c1_i32 = arith.constant 1 : i32
    %2 = tpu.memref_slice %arg14[%c1_i32] : memref<2x!tpu.dma_semaphore, #tpu.memory_space<semaphore_mem>> -> memref<1x!tpu.dma_semaphore, #tpu.memory_space<semaphore_mem>>
    %3 = tpu.memref_squeeze %2 : memref<1x!tpu.dma_semaphore, #tpu.memory_space<semaphore_mem>> -> memref<!tpu.dma_semaphore, #tpu.memory_space<semaphore_mem>>
    tpu.enqueue_dma source(%arg10 : memref<256x512xbf16, #tpu.memory_space<any>>) target(%arg13 : memref<256x512xbf16, #tpu.memory_space<vmem>>) target_semaphore(%3 : memref<!tpu.dma_semaphore, #tpu.memory_space<semaphore_mem>>)
    %c0 = arith.constant 0 : index
    %c0_0 = arith.constant 0 : index
    %4 = vector.load %arg0[%c0, %c0_0] : memref<8x128xf32, #tpu.memory_space<vmem>>, vector<8x128xf32>
    %5 = arith.truncf %4 : vector<8x128xf32> to vector<8x128xbf16>
    %c0_1 = arith.constant 0 : index
    %c0_2 = arith.constant 0 : index
    %6 = vector.load %arg1[%c0_1, %c0_2] : memref<128x128xbf16, #tpu.memory_space<vmem>>, vector<128x128xbf16>
    %cst = arith.constant dense<0.000000e+00> : vector<8x128xf32>
    %7 = tpu.matmul %5, %6, %cst {dimension_numbers = #tpu.dot_dimension_numbers<[1], [0], [0], [1], [0, 0, 1, 1], [], []>} : vector<8x128xbf16>, vector<128x128xbf16>, vector<8x128xf32> -> vector<8x128xf32>
    %c0_3 = arith.constant 0 : index
    %c0_4 = arith.constant 0 : index
    %8 = vector.load %arg2[%c0_3, %c0_4] : memref<1x128xf32, #tpu.memory_space<vmem>>, vector<1x128xf32>
    %9 = vector.broadcast %8 : vector<1x128xf32> to vector<8x128xf32>
    %10 = arith.addf %7, %9 : vector<8x128xf32>
    %cst_5 = arith.constant 0.000000e+00 : f32
    %11 = vector.broadcast %cst_5 : f32 to vector<8x128xf32>
    %12 = arith.maximumf %10, %11 : vector<8x128xf32>
    %c0_6 = arith.constant 0 : index
    %c0_7 = arith.constant 0 : index
    %13 = vector.load %arg3[%c0_6, %c0_7] : memref<1x128xf32, #tpu.memory_space<vmem>>, vector<1x128xf32>
    %c0_8 = arith.constant 0 : index
    %c0_9 = arith.constant 0 : index
    %14 = vector.load %arg4[%c0_8, %c0_9] : memref<1x128xf32, #tpu.memory_space<vmem>>, vector<1x128xf32>
    %cst_10 = arith.constant dense<0.000000e+00> : vector<128xf32>
    %15 = vector.multi_reduction <add>, %12, %cst_10 [0] : vector<8x128xf32> to vector<128xf32>
    %16 = vector.shape_cast %15 : vector<128xf32> to vector<1x128xf32>
    %cst_11 = arith.constant 8.000000e+00 : f32
    %17 = vector.broadcast %cst_11 : f32 to vector<1x128xf32>
    %18 = arith.divf %16, %17 : vector<1x128xf32>
    %19 = vector.broadcast %18 : vector<1x128xf32> to vector<8x128xf32>
    %20 = arith.subf %12, %19 : vector<8x128xf32>
    %21 = arith.mulf %20, %20 : vector<8x128xf32>
    %cst_12 = arith.constant dense<0.000000e+00> : vector<128xf32>
    %22 = vector.multi_reduction <add>, %21, %cst_12 [0] : vector<8x128xf32> to vector<128xf32>
    %23 = vector.shape_cast %22 : vector<128xf32> to vector<1x128xf32>
    %cst_13 = arith.constant 8.000000e+00 : f32
    %24 = vector.broadcast %cst_13 : f32 to vector<1x128xf32>
    %25 = arith.divf %23, %24 : vector<1x128xf32>
    %cst_14 = arith.constant 9.99999974E-6 : f32
    %26 = vector.broadcast %cst_14 : f32 to vector<1x128xf32>
    %27 = arith.addf %25, %26 : vector<1x128xf32>
    %28 = math.rsqrt %27 : vector<1x128xf32>
    %29 = arith.mulf %13, %28 : vector<1x128xf32>
    %30 = arith.mulf %18, %29 : vector<1x128xf32>
    %31 = arith.subf %14, %30 : vector<1x128xf32>
    %32 = vector.broadcast %29 : vector<1x128xf32> to vector<8x128xf32>
    %33 = arith.mulf %12, %32 : vector<8x128xf32>
    %34 = vector.broadcast %31 : vector<1x128xf32> to vector<8x128xf32>
    %35 = arith.addf %33, %34 : vector<8x128xf32>
    %c0_i32_15 = arith.constant 0 : i32
    %36 = tpu.memref_slice %arg14[%c0_i32_15] : memref<2x!tpu.dma_semaphore, #tpu.memory_space<semaphore_mem>> -> memref<1x!tpu.dma_semaphore, #tpu.memory_space<semaphore_mem>>
    %37 = tpu.memref_squeeze %36 : memref<1x!tpu.dma_semaphore, #tpu.memory_space<semaphore_mem>> -> memref<!tpu.dma_semaphore, #tpu.memory_space<semaphore_mem>>
    tpu.wait_dma2 semaphore(%37 : memref<!tpu.dma_semaphore, #tpu.memory_space<semaphore_mem>>) src(%arg9 : memref<128x256xbf16, #tpu.memory_space<any>>) dst(%arg12 : memref<128x256xbf16, #tpu.memory_space<vmem>>)
    %38 = arith.truncf %35 : vector<8x128xf32> to vector<8x128xbf16>
    %c0_16 = arith.constant 0 : index
    %c0_17 = arith.constant 0 : index
    %39 = vector.load %arg12[%c0_16, %c0_17] : memref<128x256xbf16, #tpu.memory_space<vmem>>, vector<128x256xbf16>
    %cst_18 = arith.constant dense<0.000000e+00> : vector<8x256xf32>
    %40 = tpu.matmul %38, %39, %cst_18 {dimension_numbers = #tpu.dot_dimension_numbers<[1], [0], [0], [1], [0, 0, 1, 1], [], []>} : vector<8x128xbf16>, vector<128x256xbf16>, vector<8x256xf32> -> vector<8x256xf32>
    %c0_19 = arith.constant 0 : index
    %c0_20 = arith.constant 0 : index
    %41 = vector.load %arg5[%c0_19, %c0_20] : memref<1x256xf32, #tpu.memory_space<vmem>>, vector<1x256xf32>
    %42 = vector.broadcast %41 : vector<1x256xf32> to vector<8x256xf32>
    %43 = arith.addf %40, %42 : vector<8x256xf32>
    %cst_21 = arith.constant 0.000000e+00 : f32
    %44 = vector.broadcast %cst_21 : f32 to vector<8x256xf32>
    %45 = arith.maximumf %43, %44 : vector<8x256xf32>
    %c0_22 = arith.constant 0 : index
    %c0_23 = arith.constant 0 : index
    %46 = vector.load %arg6[%c0_22, %c0_23] : memref<1x256xf32, #tpu.memory_space<vmem>>, vector<1x256xf32>
    %c0_24 = arith.constant 0 : index
    %c0_25 = arith.constant 0 : index
    %47 = vector.load %arg7[%c0_24, %c0_25] : memref<1x256xf32, #tpu.memory_space<vmem>>, vector<1x256xf32>
    %cst_26 = arith.constant dense<0.000000e+00> : vector<256xf32>
    %48 = vector.multi_reduction <add>, %45, %cst_26 [0] : vector<8x256xf32> to vector<256xf32>
    %49 = vector.shape_cast %48 : vector<256xf32> to vector<1x256xf32>
    %cst_27 = arith.constant 8.000000e+00 : f32
    %50 = vector.broadcast %cst_27 : f32 to vector<1x256xf32>
    %51 = arith.divf %49, %50 : vector<1x256xf32>
    %52 = vector.broadcast %51 : vector<1x256xf32> to vector<8x256xf32>
    %53 = arith.subf %45, %52 : vector<8x256xf32>
    %54 = arith.mulf %53, %53 : vector<8x256xf32>
    %cst_28 = arith.constant dense<0.000000e+00> : vector<256xf32>
    %55 = vector.multi_reduction <add>, %54, %cst_28 [0] : vector<8x256xf32> to vector<256xf32>
    %56 = vector.shape_cast %55 : vector<256xf32> to vector<1x256xf32>
    %cst_29 = arith.constant 8.000000e+00 : f32
    %57 = vector.broadcast %cst_29 : f32 to vector<1x256xf32>
    %58 = arith.divf %56, %57 : vector<1x256xf32>
    %cst_30 = arith.constant 9.99999974E-6 : f32
    %59 = vector.broadcast %cst_30 : f32 to vector<1x256xf32>
    %60 = arith.addf %58, %59 : vector<1x256xf32>
    %61 = math.rsqrt %60 : vector<1x256xf32>
    %62 = arith.mulf %46, %61 : vector<1x256xf32>
    %63 = arith.mulf %51, %62 : vector<1x256xf32>
    %64 = arith.subf %47, %63 : vector<1x256xf32>
    %65 = vector.broadcast %62 : vector<1x256xf32> to vector<8x256xf32>
    %66 = arith.mulf %45, %65 : vector<8x256xf32>
    %67 = vector.broadcast %64 : vector<1x256xf32> to vector<8x256xf32>
    %68 = arith.addf %66, %67 : vector<8x256xf32>
    %c1_i32_31 = arith.constant 1 : i32
    %69 = tpu.memref_slice %arg14[%c1_i32_31] : memref<2x!tpu.dma_semaphore, #tpu.memory_space<semaphore_mem>> -> memref<1x!tpu.dma_semaphore, #tpu.memory_space<semaphore_mem>>
    %70 = tpu.memref_squeeze %69 : memref<1x!tpu.dma_semaphore, #tpu.memory_space<semaphore_mem>> -> memref<!tpu.dma_semaphore, #tpu.memory_space<semaphore_mem>>
    tpu.wait_dma2 semaphore(%70 : memref<!tpu.dma_semaphore, #tpu.memory_space<semaphore_mem>>) src(%arg10 : memref<256x512xbf16, #tpu.memory_space<any>>) dst(%arg13 : memref<256x512xbf16, #tpu.memory_space<vmem>>)
    %71 = arith.truncf %68 : vector<8x256xf32> to vector<8x256xbf16>
    %c0_32 = arith.constant 0 : index
    %c0_33 = arith.constant 0 : index
    %72 = vector.load %arg13[%c0_32, %c0_33] : memref<256x512xbf16, #tpu.memory_space<vmem>>, vector<256x512xbf16>
    %cst_34 = arith.constant dense<0.000000e+00> : vector<8x512xf32>
    %73 = tpu.matmul %71, %72, %cst_34 {dimension_numbers = #tpu.dot_dimension_numbers<[1], [0], [0], [1], [0, 0, 1, 1], [], []>} : vector<8x256xbf16>, vector<256x512xbf16>, vector<8x512xf32> -> vector<8x512xf32>
    %c0_35 = arith.constant 0 : index
    %c0_36 = arith.constant 0 : index
    %74 = vector.load %arg8[%c0_35, %c0_36] : memref<1x512xf32, #tpu.memory_space<vmem>>, vector<1x512xf32>
    %75 = vector.broadcast %74 : vector<1x512xf32> to vector<8x512xf32>
    %76 = arith.addf %73, %75 : vector<8x512xf32>
    %77 = arith.negf %76 : vector<8x512xf32>
    %78 = math.exp %77 : vector<8x512xf32>
    %cst_37 = arith.constant 1.000000e+00 : f32
    %79 = vector.broadcast %cst_37 : f32 to vector<8x512xf32>
    %80 = arith.addf %79, %78 : vector<8x512xf32>
    %81 = arith.divf %79, %80 : vector<8x512xf32>
    %c0_38 = arith.constant 0 : index
    %c0_39 = arith.constant 0 : index
    %82 = vector.load %arg11[%c0_38, %c0_39] : memref<8x512xf32, #tpu.memory_space<vmem>>, vector<8x512xf32>
    tpu.vector_store %arg11[%c0_38, %c0_39], %81 {strides = array<i32>} : memref<8x512xf32, #tpu.memory_space<vmem>>, vector<8x512xf32>,
    return
  }
}

</mosaic_0001>

<llo_original>
// kernel: decoder_decode.1
$region0: #{decoder_decode.1}
  #allocation0 [shape = 'u32[]', space=smem, size = 0x4, offset = 0x4, fixed_abs, tag = 'smem constant byte address 0x4 - core index']
  #allocation1 [shape = 'u32[144,128]{1,0:T(1,128)}', space=vmem, size = 0x12000, scoped, tag = 'internal scratch']
  #allocation2 [shape = 'bf16[128,256]{1,0:T(8,128)(2,1)}', space=vmem, size = 0x10000, scoped, tag = 'scratch operand']
  #allocation3 [shape = 'bf16[256,512]{1,0:T(8,128)(2,1)}', space=vmem, size = 0x40000, scoped, tag = 'scratch operand']
  #allocation4 [shape = 's32[2]{0}', space=sflag, size = 0x8, scoped, tag = 'scratch operand']
  #allocation12 [shape = 's32[]', space=sflag, size = 0x4, offset = 0, fixed_abs, tag = 'sflag constant byte address 0x0 - dummy sync flag']
  #allocation13 [shape = 's32[]', space=sflag, size = 0x4, offset = 0, fixed_abs, tag = 'sflag constant byte address 0x0 - dummy sync flag']
  #allocation14 [shape = 'u32[]', space=smem, size = 0x4, offset = 0x44, fixed_abs, tag = 'smem constant byte address 0x44 - assertion arg 0']
  #allocation15 [shape = 'u32[]', space=smem, size = 0x4, offset = 0x48, fixed_abs, tag = 'smem constant byte address 0x48 - assertion arg 1']
  #allocation16 [shape = 's32[]', space=sflag, size = 0x4, offset = 0, fixed_abs, tag = 'sflag constant byte address 0x0 - dummy sync flag']
  #allocation17 [shape = 's32[]', space=sflag, size = 0x4, offset = 0, fixed_abs, tag = 'sflag constant byte address 0x0 - dummy sync flag']
  %s0 = inlined_call_operand.vmem [shape: f32[8,128], index: 0, kind: input, shape index: {}]
  %s1 = inlined_call_operand.hbm [shape: bf16[128,128], index: 1, kind: input, shape index: {}]
  %s2 = inlined_call_operand.vmem [shape: f32[1,128], index: 2, kind: input, shape index: {}]
  %s3 = inlined_call_operand.vmem [shape: f32[1,128], index: 3, kind: input, shape index: {}]
  %s4 = inlined_call_operand.vmem [shape: f32[1,128], index: 4, kind: input, shape index: {}]
  %s5 = inlined_call_operand.hbm [shape: f32[1,256], index: 5, kind: input, shape index: {}]
  %s6 = inlined_call_operand.vmem [shape: f32[1,256], index: 6, kind: input, shape index: {}]
  %s7 = inlined_call_operand.vmem [shape: f32[1,256], index: 7, kind: input, shape index: {}]
  %s8 = inlined_call_operand.hbm [shape: f32[1,512], index: 8, kind: input, shape index: {}]
  %s9 = inlined_call_operand.hbm [shape: bf16[128,256], index: 9, kind: input, shape index: {}]
  %s10 = inlined_call_operand.hbm [shape: bf16[256,512], index: 10, kind: input, shape index: {}]
  %s11 = inlined_call_operand.hbm [shape: f32[8,512], index: 11, kind: output, shape index: {}]
  %s12 = sld [smem:[#allocation0]]
  $region66: #{decoder_decode.1} parent=0
    _
  %s14 = ssub.s32 1, %s12
  %s15 = scalar_select 0, %s14, %s12
  $region1: #{decoder_decode.1} parent=0
    #allocation5 [shape = 'u8[32768]{0}', space=vmem, size = 0x8000, scoped, tag = 'input window, operand 1, single buffered']
    #allocation6 [shape = 's32[1]{0}', space=sflag, size = 0x4, scoped, tag = 'scoped memory for decoder_decode.1']
    #allocation7 [shape = 's32[1]{0}', space=sflag, size = 0x4, scoped, tag = 'scoped memory for decoder_decode.1']
    #allocation8 [shape = 'u8[1024]{0}', space=vmem, size = 0x400, scoped, tag = 'input window, operand 5, single buffered']
    #allocation9 [shape = 's32[1]{0}', space=sflag, size = 0x4, scoped, tag = 'scoped memory for decoder_decode.1']
    #allocation10 [shape = 'u8[2048]{0}', space=vmem, size = 0x800, scoped, tag = 'input window, operand 8, single buffered']
    #allocation11 [shape = 'u8[16384]{0}', space=vmem, size = 0x4000, scoped, tag = 'output window, operand 0, single buffered']
    %16 = vsyncpa [#allocation6], 0
    %17 = vsyncpa [#allocation9], 0
    %18 = vsyncpa [#allocation7], 0
    // Predicated region
    $region2: #{decoder_decode.1} parent=1 // pred_check
      _
    $region3: #{decoder_decode.1} parent=1 // pred_check_branch
      %20 = sbr.rel (0) target = $region5
    $region4: #{decoder_decode.1} parent=1 // pred_region
      _
    $region5: #{decoder_decode.1} parent=1 // pred_fallthru
      _
    // Predicated region
    $region6: #{decoder_decode.1} parent=1 // pred_check
      _
    $region7: #{decoder_decode.1} parent=1 // pred_check_branch
      %22 = sbr.rel (0) target = $region9
    $region8: #{decoder_decode.1} parent=1 // pred_region
      %s24 = ssub.s32 1024, 1024
      %25 = vsyncadd [#allocation6], %s24
      %s26 = sshll.u32 [#allocation5], 4
      %s27 = int_to_ptr.vmem [resolvable:$true] %s26
      %32 = dma.hbm_to_vmem [thread:$0]  %s1, 1024, %s27, [#allocation6], 64, 64, 4
    $region9: #{decoder_decode.1} parent=1 // pred_fallthru
      _
    // Predicated region
    $region10: #{decoder_decode.1} parent=1 // pred_check
      _
    $region11: #{decoder_decode.1} parent=1 // pred_check_branch
      %34 = sbr.rel (0) target = $region13
    $region12: #{decoder_decode.1} parent=1 // pred_region
      _
    $region13: #{decoder_decode.1} parent=1 // pred_fallthru
      _
    // Predicated region
    $region14: #{decoder_decode.1} parent=1 // pred_check
      _
    $region15: #{decoder_decode.1} parent=1 // pred_check_branch
      %36 = sbr.rel (0) target = $region17
    $region16: #{decoder_decode.1} parent=1 // pred_region
      _
    $region17: #{decoder_decode.1} parent=1 // pred_fallthru
      _
    // Predicated region
    $region18: #{decoder_decode.1} parent=1 // pred_check
      _
    $region19: #{decoder_decode.1} parent=1 // pred_check_branch
      %38 = sbr.rel (0) target = $region21
    $region20: #{decoder_decode.1} parent=1 // pred_region
      _
    $region21: #{decoder_decode.1} parent=1 // pred_fallthru
      _
    // Predicated region
    $region22: #{decoder_decode.1} parent=1 // pred_check
      _
    $region23: #{decoder_decode.1} parent=1 // pred_check_branch
      %40 = sbr.rel (0) target = $region25
    $region24: #{decoder_decode.1} parent=1 // pred_region
      %s42 = ssub.s32 32, 32
      %43 = vsyncadd [#allocation9], %s42
      %s45 = sshll.u32 [#allocation8], 4
      %s46 = int_to_ptr.vmem [resolvable:$true] %s45
      %48 = dma.hbm_to_vmem [thread:$0]  %s5, 32, %s46, [#allocation9]
    $region25: #{decoder_decode.1} parent=1 // pred_fallthru
      _
    // Predicated region
    $region26: #{decoder_decode.1} parent=1 // pred_check
      _
    $region27: #{decoder_decode.1} parent=1 // pred_check_branch
      %50 = sbr.rel (0) target = $region29
    $region28: #{decoder_decode.1} parent=1 // pred_region
      _
    $region29: #{decoder_decode.1} parent=1 // pred_fallthru
      _
    // Predicated region
    $region30: #{decoder_decode.1} parent=1 // pred_check
      _
    $region31: #{decoder_decode.1} parent=1 // pred_check_branch
      %52 = sbr.rel (0) target = $region33
    $region32: #{decoder_decode.1} parent=1 // pred_region
      _
    $region33: #{decoder_decode.1} parent=1 // pred_fallthru
      _
    // Predicated region
    $region34: #{decoder_decode.1} parent=1 // pred_check
      _
    $region35: #{decoder_decode.1} parent=1 // pred_check_branch
      %54 = sbr.rel (0) target = $region37
    $region36: #{decoder_decode.1} parent=1 // pred_region
      %s56 = ssub.s32 64, 64
      %57 = vsyncadd [#allocation9], %s56
      %s59 = sshll.u32 [#allocation10], 4
      %s60 = int_to_ptr.vmem [resolvable:$true] %s59
      %62 = dma.hbm_to_vmem [thread:$0]  %s8, 64, %s60, [#allocation9]
    $region37: #{decoder_decode.1} parent=1 // pred_fallthru
      _
    // Predicated region
    $region38: #{decoder_decode.1} parent=1 // pred_check
      _
    $region39: #{decoder_decode.1} parent=1 // pred_check_branch
      %64 = sbr.rel (0) target = $region41
    $region40: #{decoder_decode.1} parent=1 // pred_region
      %65 = dma.done [#allocation6], 1024
    $region41: #{decoder_decode.1} parent=1 // pred_fallthru
      _
    // Predicated region
    $region42: #{decoder_decode.1} parent=1 // pred_check
      _
    $region43: #{decoder_decode.1} parent=1 // pred_check_branch
      %67 = sbr.rel (0) target = $region45
    $region44: #{decoder_decode.1} parent=1 // pred_region
      %68 = dma.done [#allocation9], 32
    $region45: #{decoder_decode.1} parent=1 // pred_fallthru
      _
    // Predicated region
    $region46: #{decoder_decode.1} parent=1 // pred_check
      _
    $region47: #{decoder_decode.1} parent=1 // pred_check_branch
      %70 = sbr.rel (0) target = $region49
    $region48: #{decoder_decode.1} parent=1 // pred_region
      %71 = dma.done [#allocation9], 64
    $region49: #{decoder_decode.1} parent=1 // pred_fallthru
      _
    // Predicated region
    $region50: #{decoder_decode.1} parent=1 // pred_check
      _
    $region51: #{decoder_decode.1} parent=1 // pred_check_branch
      %74 = sbr.rel target = $region53
    $region52: #{decoder_decode.1} parent=1 // pred_region
      %75 = sst [smem:[#allocation14]] [#allocation13]
      %76 = sst [smem:[#allocation15]] [#allocation12]
    $region53: #{decoder_decode.1} parent=1 // pred_fallthru
      _
    %78 = shalt.err (0)
    %s80 = sshll.u32 [#allocation2], 4
    %s81 = int_to_ptr.vmem [resolvable:$true] %s80
    %83 = dma.hbm_to_vmem [thread:$0]  %s9, 2048, %s81, [#allocation4]
    %s84 = scalar_lea.sflag [#allocation4], 1
    // Predicated region
    $region54: #{decoder_decode.1} parent=1 // pred_check
      _
    $region55: #{decoder_decode.1} parent=1 // pred_check_branch
      %86 = sbr.rel target = $region57
    $region56: #{decoder_decode.1} parent=1 // pred_region
      %87 = sst [smem:[#allocation14]] [#allocation17]
      %88 = sst [smem:[#allocation15]] [#allocation16]
    $region57: #{decoder_decode.1} parent=1 // pred_fallthru
      _
    %90 = shalt.err (0)
    %s92 = sshll.u32 [#allocation3], 4
    %s93 = int_to_ptr.vmem [resolvable:$true] %s92
    %95 = dma.hbm_to_vmem [thread:$0]  %s10, 8192, %s93, %s84
    %v96 = vld [vmem:[%s0] sm:$0xff]
    %v97 = vpack.c.bf16 %v96, %v96
    %v98 = vld [vmem:[#allocation5] sm:$0xf]
    %v99 = vld [vmem:[#allocation5 + $0x4] sm:$0xf]
    %v100 = vld [vmem:[#allocation5 + $0x8] sm:$0xf]
    %v101 = vld [vmem:[#allocation5 + $0xc] sm:$0xf]
    %v102 = vld [vmem:[#allocation5 + $0x10] sm:$0xf]
    %v103 = vld [vmem:[#allocation5 + $0x14] sm:$0xf]
    %v104 = vld [vmem:[#allocation5 + $0x18] sm:$0xf]
    %v105 = vld [vmem:[#allocation5 + $0x1c] sm:$0xf]
    %v106 = vld [vmem:[#allocation5 + $0x20] sm:$0xf]
    %v107 = vld [vmem:[#allocation5 + $0x24] sm:$0xf]
    %v108 = vld [vmem:[#allocation5 + $0x28] sm:$0xf]
    %v109 = vld [vmem:[#allocation5 + $0x2c] sm:$0xf]
    %v110 = vld [vmem:[#allocation5 + $0x30] sm:$0xf]
    %v111 = vld [vmem:[#allocation5 + $0x34] sm:$0xf]
    %v112 = vld [vmem:[#allocation5 + $0x38] sm:$0xf]
    %v113 = vld [vmem:[#allocation5 + $0x3c] sm:$0xf]
    %v114 = vld [vmem:[%s2] sm:$0x1]
    %v116 = vlaneseq
    %v117 = vshrl.u32 %v116, 7
    %v118 = vsub.s32 0, %v117
    %v119 = vrot.slane %v114, %v118
    %v137 = vunpack.c.l.b16 %v98
    %v138 = vunpack.c.l.b16 %v99
    %v139 = vunpack.c.l.b16 %v100
    %v140 = vunpack.c.l.b16 %v101
    %v141 = vunpack.c.l.b16 %v102
    %v142 = vunpack.c.l.b16 %v103
    %v143 = vunpack.c.l.b16 %v104
    %v144 = vunpack.c.l.b16 %v105
    %v145 = vunpack.c.l.b16 %v106
    %v146 = vunpack.c.l.b16 %v107
    %v147 = vunpack.c.l.b16 %v108
    %v148 = vunpack.c.l.b16 %v109
    %v149 = vunpack.c.l.b16 %v110
    %v150 = vunpack.c.l.b16 %v111
    %v151 = vunpack.c.l.b16 %v112
    %v152 = vunpack.c.l.b16 %v113
    %v153 = vpack.c.b16 %v138, %v137
    %v154 = vpack.c.b16 %v140, %v139
    %v155 = vpack.c.b16 %v142, %v141
    %v156 = vpack.c.b16 %v144, %v143
    %v157 = vpack.c.b16 %v146, %v145
    %v158 = vpack.c.b16 %v148, %v147
    %v159 = vpack.c.b16 %v150, %v149
    %v160 = vpack.c.b16 %v152, %v151
    %169 = vmatprep.subr.bf16.mxu0 0
    %170 = vmatpush1.bf16.msra.mxu0 %v160
    %171 = vmatprep.subr.bf16.mxu0 0
    %172 = vmatpush1.bf16.msra.mxu0 %v159
    %173 = vmatprep.subr.bf16.mxu0 0
    %174 = vmatpush1.bf16.msra.mxu0 %v158
    %175 = vmatprep.subr.bf16.mxu0 0
    %176 = vmatpush1.bf16.msra.mxu0 %v157
    %177 = vmatprep.subr.bf16.mxu0 0
    %178 = vmatpush1.bf16.msra.mxu0 %v156
    %179 = vmatprep.subr.bf16.mxu0 0
    %180 = vmatpush1.bf16.msra.mxu0 %v155
    %181 = vmatprep.subr.bf16.mxu0 0
    %182 = vmatpush1.bf16.msra.mxu0 %v154
    %183 = vmatprep.subr.bf16.mxu0 0
    %184 = vmatpush1.bf16.msra.mxu0 %v153
    %185 = vmatprep.subr.bf16.mxu0 0
    %186 = vmatpush2.bf16.msra.mxu0 0
    %187 = vmatprep.subr.bf16.mxu0 0
    %188 = vmatpush2.bf16.msra.mxu0 0
    %189 = vmatprep.subr.bf16.mxu0 0
    %190 = vmatpush2.bf16.msra.mxu0 0
    %191 = vmatprep.subr.bf16.mxu0 0
    %192 = vmatpush2.bf16.msra.mxu0 0
    %193 = vmatprep.subr.bf16.mxu0 0
    %194 = vmatpush2.bf16.msra.mxu0 0
    %195 = vmatprep.subr.bf16.mxu0 0
    %196 = vmatpush2.bf16.msra.mxu0 0
    %197 = vmatprep.subr.bf16.mxu0 0
    %198 = vmatpush2.bf16.msra.mxu0 0
    %199 = vmatprep.subr.bf16.mxu0 0
    %200 = vmatpush2.bf16.msra.mxu0 0
    %201 = vmatprep.mubr.bf16.mxu0 0
    %202 = vmatmul.mubr.bf16.gmra.mxu0 %v97
    %v203 = vpop.f32.mrf.mxu0
    %v204 = vadd.f32 %v119, %v203
    %v205 = vpop.f32.mrf.mxu0
    %v206 = vpop.f32.mrf.mxu0
    %v207 = vpop.f32.mrf.mxu0
    %208 = vdwg.mxu0
    %v209 = vmax.f32 %v204, 0.0
    %v210 = vld [vmem:[%s3] sm:$0x1]
    %v211 = vld [vmem:[%s4] sm:$0x1]
    %v212 = vrot.slane %v209, 4
    %v213 = vadd.f32 %v209, %v212
    %v214 = vrot.slane %v213, 2
    %v215 = vadd.f32 %v213, %v214
    %v216 = vrot.slane %v215, 1
    %v217 = vadd.f32 %v215, %v216
    %v218 = vrcp.pop 8.0
    %v219 = vmul.f32 %v217, %v218
    %v220 = vsub.f32 %v209, %v219
    %v221 = vmul.f32 %v220, %v220
    %v222 = vrot.slane %v221, 4
    %v223 = vadd.f32 %v221, %v222
    %v224 = vrot.slane %v223, 2
    %v225 = vadd.f32 %v223, %v224
    %v226 = vrot.slane %v225, 1
    %v227 = vadd.f32 %v225, %v226
    %v228 = vmul.f32 %v227, %v218
    %v229 = vadd.f32 %v228, 1e-05
    %v230 = vrsqrt.pop %v229
    %v231 = vmul.f32 %v210, %v230
    %v232 = vmul.f32 %v219, %v231
    %v233 = vsub.f32 %v211, %v232
    %v235 = vlaneseq
    %v236 = vshrl.u32 %v235, 7
    %v237 = vsub.s32 0, %v236
    %v238 = vrot.slane %v231, %v237
    %v240 = vmul.f32 %v209, %v238
    %v242 = vlaneseq
    %v243 = vshrl.u32 %v242, 7
    %v244 = vsub.s32 0, %v243
    %v245 = vrot.slane %v233, %v244
    %v247 = vadd.f32 %v240, %v245
    %s248 = smul.u32 4, 16
    %s249 = smul.u32 %s248, 2
    %s250 = sshll.u32 %s249, 4
    %251 = dma.done [#allocation4], %s250
    %v252 = vpack.c.bf16 %v247, %v247
    %v253 = vld [vmem:[#allocation2] sm:$0xff]
    %v254 = vld [vmem:[#allocation2 + $0x8] sm:$0xff]
    %v255 = vld [vmem:[#allocation2 + $0x10] sm:$0xff]
    %v256 = vld [vmem:[#allocation2 + $0x18] sm:$0xff]
    %v257 = vld [vmem:[#allocation2 + $0x20] sm:$0xff]
    %v258 = vld [vmem:[#allocation2 + $0x28] sm:$0xff]
    %v259 = vld [vmem:[#allocation2 + $0x30] sm:$0xff]
    %v260 = vld [vmem:[#allocation2 + $0x38] sm:$0xff]
    %v261 = vld [vmem:[#allocation2 + $0x40] sm:$0xff]
    %v262 = vld [vmem:[#allocation2 + $0x48] sm:$0xff]
    %v263 = vld [vmem:[#allocation2 + $0x50] sm:$0xff]
    %v264 = vld [vmem:[#allocation2 + $0x58] sm:$0xff]
    %v265 = vld [vmem:[#allocation2 + $0x60] sm:$0xff]
    %v266 = vld [vmem:[#allocation2 + $0x68] sm:$0xff]
    %v267 = vld [vmem:[#allocation2 + $0x70] sm:$0xff]
    %v268 = vld [vmem:[#allocation2 + $0x78] sm:$0xff]
    %v269 = vld [vmem:[#allocation8] sm:$0x3]
    %v271 = vlaneseq
    %v272 = vshrl.u32 %v271, 7
    %v273 = vsub.s32 0, %v272
    %v274 = vrot.slane %v269, %v273
    %v275 = vlaneseq
    %v276 = vshrl.u32 %v275, 7
    %v277 = vsub.s32 1, %v276
    %v278 = vrot.slane %v269, %v277
    %v297 = vunpack.c.l.b16 %v253
    %v298 = vunpack.c.h.b16 %v253
    %v299 = vunpack.c.l.b16 %v254
    %v300 = vunpack.c.h.b16 %v254
    %v301 = vunpack.c.l.b16 %v255
    %v302 = vunpack.c.h.b16 %v255
    %v303 = vunpack.c.l.b16 %v256
    %v304 = vunpack.c.h.b16 %v256
    %v305 = vunpack.c.l.b16 %v257
    %v306 = vunpack.c.h.b16 %v257
    %v307 = vunpack.c.l.b16 %v258
    %v308 = vunpack.c.h.b16 %v258
    %v309 = vunpack.c.l.b16 %v259
    %v310 = vunpack.c.h.b16 %v259
    %v311 = vunpack.c.l.b16 %v260
    %v312 = vunpack.c.h.b16 %v260
    %v313 = vunpack.c.l.b16 %v261
    %v314 = vunpack.c.h.b16 %v261
    %v315 = vunpack.c.l.b16 %v262
    %v316 = vunpack.c.h.b16 %v262
    %v317 = vunpack.c.l.b16 %v263
    %v318 = vunpack.c.h.b16 %v263
    %v319 = vunpack.c.l.b16 %v264
    %v320 = vunpack.c.h.b16 %v264
    %v321 = vunpack.c.l.b16 %v265
    %v322 = vunpack.c.h.b16 %v265
    %v323 = vunpack.c.l.b16 %v266
    %v324 = vunpack.c.h.b16 %v266
    %v325 = vunpack.c.l.b16 %v267
    %v326 = vunpack.c.h.b16 %v267
    %v327 = vunpack.c.l.b16 %v268
    %v328 = vunpack.c.h.b16 %v268
    %v329 = vpack.c.b16 %v299, %v297
    %v330 = vpack.c.b16 %v300, %v298
    %v331 = vpack.c.b16 %v303, %v301
    %v332 = vpack.c.b16 %v304, %v302
    %v333 = vpack.c.b16 %v307, %v305
    %v334 = vpack.c.b16 %v308, %v306
    %v335 = vpack.c.b16 %v311, %v309
    %v336 = vpack.c.b16 %v312, %v310
    %v337 = vpack.c.b16 %v315, %v313
    %v338 = vpack.c.b16 %v316, %v314
    %v339 = vpack.c.b16 %v319, %v317
    %v340 = vpack.c.b16 %v320, %v318
    %v341 = vpack.c.b16 %v323, %v321
    %v342 = vpack.c.b16 %v324, %v322
    %v343 = vpack.c.b16 %v327, %v325
    %v344 = vpack.c.b16 %v328, %v326
    %361 = vmatprep.subr.bf16.mxu0 %v344
    %362 = vmatpush1.bf16.msra.mxu0 %v343
    %363 = vmatprep.subr.bf16.mxu0 %v342
    %364 = vmatpush1.bf16.msra.mxu0 %v341
    %365 = vmatprep.subr.bf16.mxu0 %v340
    %366 = vmatpush1.bf16.msra.mxu0 %v339
    %367 = vmatprep.subr.bf16.mxu0 %v338
    %368 = vmatpush1.bf16.msra.mxu0 %v337
    %369 = vmatprep.subr.bf16.mxu0 %v336
    %370 = vmatpush1.bf16.msra.mxu0 %v335
    %371 = vmatprep.subr.bf16.mxu0 %v334
    %372 = vmatpush1.bf16.msra.mxu0 %v333
    %373 = vmatprep.subr.bf16.mxu0 %v332
    %374 = vmatpush1.bf16.msra.mxu0 %v331
    %375 = vmatprep.subr.bf16.mxu0 %v330
    %376 = vmatpush1.bf16.msra.mxu0 %v329
    %377 = vmatprep.subr.bf16.mxu0 0
    %378 = vmatpush2.bf16.msra.mxu0 0
    %379 = vmatprep.subr.bf16.mxu0 0
    %380 = vmatpush2.bf16.msra.mxu0 0
    %381 = vmatprep.subr.bf16.mxu0 0
    %382 = vmatpush2.bf16.msra.mxu0 0
    %383 = vmatprep.subr.bf16.mxu0 0
    %384 = vmatpush2.bf16.msra.mxu0 0
    %385 = vmatprep.subr.bf16.mxu0 0
    %386 = vmatpush2.bf16.msra.mxu0 0
    %387 = vmatprep.subr.bf16.mxu0 0
    %388 = vmatpush2.bf16.msra.mxu0 0
    %389 = vmatprep.subr.bf16.mxu0 0
    %390 = vmatpush2.bf16.msra.mxu0 0
    %391 = vmatprep.subr.bf16.mxu0 0
    %392 = vmatpush2.bf16.msra.mxu0 0
    %393 = vmatprep.mubr.bf16.mxu0 0
    %394 = vmatmul.mubr.bf16.gmra.mxu0 %v252
    %v395 = vpop.f32.mrf.mxu0
    %v396 = vadd.f32 %v274, %v395
    %v397 = vpop.f32.mrf.mxu0
    %v398 = vadd.f32 %v278, %v397
    %v399 = vpop.f32.mrf.mxu0
    %v400 = vpop.f32.mrf.mxu0
    %401 = vdwg.mxu0
    %v402 = vmax.f32 %v396, 0.0
    %v403 = vmax.f32 %v398, 0.0
    %v404 = vld [vmem:[%s6] sm:$0x3]
    %v405 = vld [vmem:[%s7] sm:$0x3]
    %v406 = vrot.slane %v402, 4
    %v407 = vadd.f32 %v402, %v406
    %v408 = vrot.slane %v407, 2
    %v409 = vadd.f32 %v407, %v408
    %v410 = vrot.slane %v409, 1
    %v411 = vadd.f32 %v409, %v410
    %v412 = vrot.slane %v403, 4
    %v413 = vadd.f32 %v403, %v412
    %v414 = vrot.slane %v413, 2
    %v415 = vadd.f32 %v413, %v414
    %v416 = vrot.slane %v415, 1
    %v417 = vadd.f32 %v415, %v416
    %v418 = vmul.f32 %v411, %v218
    %v419 = vmul.f32 %v417, %v218
    %v420 = vsub.f32 %v402, %v418
    %v421 = vsub.f32 %v403, %v419
    %v422 = vmul.f32 %v420, %v420
    %v423 = vmul.f32 %v421, %v421
    %v424 = vrot.slane %v422, 4
    %v425 = vadd.f32 %v422, %v424
    %v426 = vrot.slane %v425, 2
    %v427 = vadd.f32 %v425, %v426
    %v428 = vrot.slane %v427, 1
    %v429 = vadd.f32 %v427, %v428
    %v430 = vrot.slane %v423, 4
    %v431 = vadd.f32 %v423, %v430
    %v432 = vrot.slane %v431, 2
    %v433 = vadd.f32 %v431, %v432
    %v434 = vrot.slane %v433, 1
    %v435 = vadd.f32 %v433, %v434
    %v436 = vmul.f32 %v429, %v218
    %v437 = vmul.f32 %v435, %v218
    %v438 = vadd.f32 %v436, 1e-05
    %v439 = vadd.f32 %v437, 1e-05
    %v440 = vrsqrt.pop %v438
    %v441 = vrsqrt.pop %v439
    %v444 = vcombine.low %v440, %v441
    %v446 = vunpack.c.l.s4 1966171168
    %v447 = vunpack.c.0.s8 %v446
    %v448 = vlaneseq
    %v449 = vshrl.u32 %v448, 7
    %v450 = vsub.s32 %v447, %v449
    %v451 = vrot.slane %v444, %v450
    %v453 = vunpack.c.l.s4 1966171168
    %v454 = vunpack.c.0.s8 %v453
    %v455 = vlaneseq
    %v456 = vshrl.u32 %v455, 7
    %v457 = vsub.s32 %v454, %v456
    %v458 = vrot.slane %v451, %v457
    %v460 = vmul.f32 %v404, %v458
    %v462 = vlaneseq
    %v463 = vshrl.u32 %v462, 7
    %v464 = vsub.s32 0, %v463
    %v465 = vrot.slane %v460, %v464
    %v466 = vlaneseq
    %v467 = vshrl.u32 %v466, 7
    %v468 = vsub.s32 1, %v467
    %v469 = vrot.slane %v460, %v468
    %v472 = vmul.f32 %v418, %v465
    %v473 = vmul.f32 %v419, %v469
    %v476 = vcombine.low %v472, %v473
    %v478 = vunpack.c.l.s4 1966171168
    %v479 = vunpack.c.0.s8 %v478
    %v480 = vlaneseq
    %v481 = vshrl.u32 %v480, 7
    %v482 = vsub.s32 %v479, %v481
    %v483 = vrot.slane %v476, %v482
    %v485 = vunpack.c.l.s4 1966171168
    %v486 = vunpack.c.0.s8 %v485
    %v487 = vlaneseq
    %v488 = vshrl.u32 %v487, 7
    %v489 = vsub.s32 %v486, %v488
    %v490 = vrot.slane %v483, %v489
    %v492 = vsub.f32 %v405, %v490
    %v493 = vmul.f32 %v402, %v465
    %v494 = vmul.f32 %v403, %v469
    %v496 = vlaneseq
    %v497 = vshrl.u32 %v496, 7
    %v498 = vsub.s32 0, %v497
    %v499 = vrot.slane %v492, %v498
    %v500 = vlaneseq
    %v501 = vshrl.u32 %v500, 7
    %v502 = vsub.s32 1, %v501
    %v503 = vrot.slane %v492, %v502
    %v506 = vadd.f32 %v493, %v499
    %v507 = vadd.f32 %v494, %v503
    %s508 = smul.u32 4, 32
    %s509 = smul.u32 %s508, 4
    %s510 = sshll.u32 %s509, 4
    %511 = dma.done %s84, %s510
    %v512 = vpack.c.bf16 %v506, %v506
    %v513 = vpack.c.bf16 %v507, %v507
    %v514 = vld [vmem:[#allocation3] sm:$0xff]
    %v515 = vld [vmem:[#allocation3 + $0x8] sm:$0xff]
    %v516 = vld [vmem:[#allocation3 + $0x10] sm:$0xff]
    %v517 = vld [vmem:[#allocation3 + $0x18] sm:$0xff]
    %v518 = vld [vmem:[#allocation3 + $0x20] sm:$0xff]
    %v519 = vld [vmem:[#allocation3 + $0x28] sm:$0xff]
    %v520 = vld [vmem:[#allocation3 + $0x30] sm:$0xff]
    %v521 = vld [vmem:[#allocation3 + $0x38] sm:$0xff]
    %v522 = vld [vmem:[#allocation3 + $0x40] sm:$0xff]
    %v523 = vld [vmem:[#allocation3 + $0x48] sm:$0xff]
    %v524 = vld [vmem:[#allocation3 + $0x50] sm:$0xff]
    %v525 = vld [vmem:[#allocation3 + $0x58] sm:$0xff]
    %v526 = vld [vmem:[#allocation3 + $0x60] sm:$0xff]
    %v527 = vld [vmem:[#allocation3 + $0x68] sm:$0xff]
    %v528 = vld [vmem:[#allocation3 + $0x70] sm:$0xff]
    %v529 = vld [vmem:[#allocation3 + $0x78] sm:$0xff]
    %v530 = vld [vmem:[#allocation3 + $0x80] sm:$0xff]
    %v531 = vld [vmem:[#allocation3 + $0x88] sm:$0xff]
    %v532 = vld [vmem:[#allocation3 + $0x90] sm:$0xff]
    %v533 = vld [vmem:[#allocation3 + $0x98] sm:$0xff]
    %v534 = vld [vmem:[#allocation3 + $0xa0] sm:$0xff]
    %v535 = vld [vmem:[#allocation3 + $0xa8] sm:$0xff]
    %v536 = vld [vmem:[#allocation3 + $0xb0] sm:$0xff]
    %v537 = vld [vmem:[#allocation3 + $0xb8] sm:$0xff]
    %v538 = vld [vmem:[#allocation3 + $0xc0] sm:$0xff]
    %v539 = vld [vmem:[#allocation3 + $0xc8] sm:$0xff]
    %v540 = vld [vmem:[#allocation3 + $0xd0] sm:$0xff]
    %v541 = vld [vmem:[#allocation3 + $0xd8] sm:$0xff]
    %v542 = vld [vmem:[#allocation3 + $0xe0] sm:$0xff]
    %v543 = vld [vmem:[#allocation3 + $0xe8] sm:$0xff]
    %v544 = vld [vmem:[#allocation3 + $0xf0] sm:$0xff]
    %v545 = vld [vmem:[#allocation3 + $0xf8] sm:$0xff]
    %v546 = vld [vmem:[#allocation3 + $0x100] sm:$0xff]
    %v547 = vld [vmem:[#allocation3 + $0x108] sm:$0xff]
    %v548 = vld [vmem:[#allocation3 + $0x110] sm:$0xff]
    %v549 = vld [vmem:[#allocation3 + $0x118] sm:$0xff]
    %v550 = vld [vmem:[#allocation3 + $0x120] sm:$0xff]
    %v551 = vld [vmem:[#allocation3 + $0x128] sm:$0xff]
    %v552 = vld [vmem:[#allocation3 + $0x130] sm:$0xff]
    %v553 = vld [vmem:[#allocation3 + $0x138] sm:$0xff]
    %v554 = vld [vmem:[#allocation3 + $0x140] sm:$0xff]
    %v555 = vld [vmem:[#allocation3 + $0x148] sm:$0xff]
    %v556 = vld [vmem:[#allocation3 + $0x150] sm:$0xff]
    %v557 = vld [vmem:[#allocation3 + $0x158] sm:$0xff]
    %v558 = vld [vmem:[#allocation3 + $0x160] sm:$0xff]
    %v559 = vld [vmem:[#allocation3 + $0x168] sm:$0xff]
    %v560 = vld [vmem:[#allocation3 + $0x170] sm:$0xff]
    %v561 = vld [vmem:[#allocation3 + $0x178] sm:$0xff]
    %v562 = vld [vmem:[#allocation3 + $0x180] sm:$0xff]
    %v563 = vld [vmem:[#allocation3 + $0x188] sm:$0xff]
    %v564 = vld [vmem:[#allocation3 + $0x190] sm:$0xff]
    %v565 = vld [vmem:[#allocation3 + $0x198] sm:$0xff]
    %v566 = vld [vmem:[#allocation3 + $0x1a0] sm:$0xff]
    %v567 = vld [vmem:[#allocation3 + $0x1a8] sm:$0xff]
    %v568 = vld [vmem:[#allocation3 + $0x1b0] sm:$0xff]
    %v569 = vld [vmem:[#allocation3 + $0x1b8] sm:$0xff]
    %v570 = vld [vmem:[#allocation3 + $0x1c0] sm:$0xff]
    %v571 = vld [vmem:[#allocation3 + $0x1c8] sm:$0xff]
    %v572 = vld [vmem:[#allocation3 + $0x1d0] sm:$0xff]
    %v573 = vld [vmem:[#allocation3 + $0x1d8] sm:$0xff]
    %v574 = vld [vmem:[#allocation3 + $0x1e0] sm:$0xff]
    %v575 = vld [vmem:[#allocation3 + $0x1e8] sm:$0xff]
    %v576 = vld [vmem:[#allocation3 + $0x1f0] sm:$0xff]
    %v577 = vld [vmem:[#allocation3 + $0x1f8] sm:$0xff]
    %v578 = vld [vmem:[#allocation10] sm:$0xf]
    %v580 = vlaneseq
    %v581 = vshrl.u32 %v580, 7
    %v582 = vsub.s32 0, %v581
    %v583 = vrot.slane %v578, %v582
    %v584 = vlaneseq
    %v585 = vshrl.u32 %v584, 7
    %v586 = vsub.s32 1, %v585
    %v587 = vrot.slane %v578, %v586
    %v588 = vlaneseq
    %v589 = vshrl.u32 %v588, 7
    %v590 = vsub.s32 2, %v589
    %v591 = vrot.slane %v578, %v590
    %v592 = vlaneseq
    %v593 = vshrl.u32 %v592, 7
    %v594 = vsub.s32 3, %v593
    %v595 = vrot.slane %v578, %v594
    %v664 = vunpack.c.l.b16 %v514
    %v665 = vunpack.c.h.b16 %v514
    %v666 = vunpack.c.l.b16 %v515
    %v667 = vunpack.c.h.b16 %v515
    %v668 = vunpack.c.l.b16 %v516
    %v669 = vunpack.c.h.b16 %v516
    %v670 = vunpack.c.l.b16 %v517
    %v671 = vunpack.c.h.b16 %v517
    %v672 = vunpack.c.l.b16 %v518
    %v673 = vunpack.c.h.b16 %v518
    %v674 = vunpack.c.l.b16 %v519
    %v675 = vunpack.c.h.b16 %v519
    %v676 = vunpack.c.l.b16 %v520
    %v677 = vunpack.c.h.b16 %v520
    %v678 = vunpack.c.l.b16 %v521
    %v679 = vunpack.c.h.b16 %v521
    %v680 = vunpack.c.l.b16 %v522
    %v681 = vunpack.c.h.b16 %v522
    %v682 = vunpack.c.l.b16 %v523
    %v683 = vunpack.c.h.b16 %v523
    %v684 = vunpack.c.l.b16 %v524
    %v685 = vunpack.c.h.b16 %v524
    %v686 = vunpack.c.l.b16 %v525
    %v687 = vunpack.c.h.b16 %v525
    %v688 = vunpack.c.l.b16 %v526
    %v689 = vunpack.c.h.b16 %v526
    %v690 = vunpack.c.l.b16 %v527
    %v691 = vunpack.c.h.b16 %v527
    %v692 = vunpack.c.l.b16 %v528
    %v693 = vunpack.c.h.b16 %v528
    %v694 = vunpack.c.l.b16 %v529
    %v695 = vunpack.c.h.b16 %v529
    %v696 = vunpack.c.l.b16 %v530
    %v697 = vunpack.c.h.b16 %v530
    %v698 = vunpack.c.l.b16 %v531
    %v699 = vunpack.c.h.b16 %v531
    %v700 = vunpack.c.l.b16 %v532
    %v701 = vunpack.c.h.b16 %v532
    %v702 = vunpack.c.l.b16 %v533
    %v703 = vunpack.c.h.b16 %v533
    %v704 = vunpack.c.l.b16 %v534
    %v705 = vunpack.c.h.b16 %v534
    %v706 = vunpack.c.l.b16 %v535
    %v707 = vunpack.c.h.b16 %v535
    %v708 = vunpack.c.l.b16 %v536
    %v709 = vunpack.c.h.b16 %v536
    %v710 = vunpack.c.l.b16 %v537
    %v711 = vunpack.c.h.b16 %v537
    %v712 = vunpack.c.l.b16 %v538
    %v713 = vunpack.c.h.b16 %v538
    %v714 = vunpack.c.l.b16 %v539
    %v715 = vunpack.c.h.b16 %v539
    %v716 = vunpack.c.l.b16 %v540
    %v717 = vunpack.c.h.b16 %v540
    %v718 = vunpack.c.l.b16 %v541
    %v719 = vunpack.c.h.b16 %v541
    %v720 = vunpack.c.l.b16 %v542
    %v721 = vunpack.c.h.b16 %v542
    %v722 = vunpack.c.l.b16 %v543
    %v723 = vunpack.c.h.b16 %v543
    %v724 = vunpack.c.l.b16 %v544
    %v725 = vunpack.c.h.b16 %v544
    %v726 = vunpack.c.l.b16 %v545
    %v727 = vunpack.c.h.b16 %v545
    %v728 = vunpack.c.l.b16 %v546
    %v729 = vunpack.c.h.b16 %v546
    %v730 = vunpack.c.l.b16 %v547
    %v731 = vunpack.c.h.b16 %v547
    %v732 = vunpack.c.l.b16 %v548
    %v733 = vunpack.c.h.b16 %v548
    %v734 = vunpack.c.l.b16 %v549
    %v735 = vunpack.c.h.b16 %v549
    %v736 = vunpack.c.l.b16 %v550
    %v737 = vunpack.c.h.b16 %v550
    %v738 = vunpack.c.l.b16 %v551
    %v739 = vunpack.c.h.b16 %v551
    %v740 = vunpack.c.l.b16 %v552
    %v741 = vunpack.c.h.b16 %v552
    %v742 = vunpack.c.l.b16 %v553
    %v743 = vunpack.c.h.b16 %v553
    %v744 = vunpack.c.l.b16 %v554
    %v745 = vunpack.c.h.b16 %v554
    %v746 = vunpack.c.l.b16 %v555
    %v747 = vunpack.c.h.b16 %v555
    %v748 = vunpack.c.l.b16 %v556
    %v749 = vunpack.c.h.b16 %v556
    %v750 = vunpack.c.l.b16 %v557
    %v751 = vunpack.c.h.b16 %v557
    %v752 = vunpack.c.l.b16 %v558
    %v753 = vunpack.c.h.b16 %v558
    %v754 = vunpack.c.l.b16 %v559
    %v755 = vunpack.c.h.b16 %v559
    %v756 = vunpack.c.l.b16 %v560
    %v757 = vunpack.c.h.b16 %v560
    %v758 = vunpack.c.l.b16 %v561
    %v759 = vunpack.c.h.b16 %v561
    %v760 = vunpack.c.l.b16 %v562
    %v761 = vunpack.c.h.b16 %v562
    %v762 = vunpack.c.l.b16 %v563
    %v763 = vunpack.c.h.b16 %v563
    %v764 = vunpack.c.l.b16 %v564
    %v765 = vunpack.c.h.b16 %v564
    %v766 = vunpack.c.l.b16 %v565
    %v767 = vunpack.c.h.b16 %v565
    %v768 = vunpack.c.l.b16 %v566
    %v769 = vunpack.c.h.b16 %v566
    %v770 = vunpack.c.l.b16 %v567
    %v771 = vunpack.c.h.b16 %v567
    %v772 = vunpack.c.l.b16 %v568
    %v773 = vunpack.c.h.b16 %v568
    %v774 = vunpack.c.l.b16 %v569
    %v775 = vunpack.c.h.b16 %v569
    %v776 = vunpack.c.l.b16 %v570
    %v777 = vunpack.c.h.b16 %v570
    %v778 = vunpack.c.l.b16 %v571
    %v779 = vunpack.c.h.b16 %v571
    %v780 = vunpack.c.l.b16 %v572
    %v781 = vunpack.c.h.b16 %v572
    %v782 = vunpack.c.l.b16 %v573
    %v783 = vunpack.c.h.b16 %v573
    %v784 = vunpack.c.l.b16 %v574
    %v785 = vunpack.c.h.b16 %v574
    %v786 = vunpack.c.l.b16 %v575
    %v787 = vunpack.c.h.b16 %v575
    %v788 = vunpack.c.l.b16 %v576
    %v789 = vunpack.c.h.b16 %v576
    %v790 = vunpack.c.l.b16 %v577
    %v791 = vunpack.c.h.b16 %v577
    %v792 = vpack.c.b16 %v668, %v664
    %v793 = vpack.c.b16 %v669, %v665
    %v794 = vpack.c.b16 %v670, %v666
    %v795 = vpack.c.b16 %v671, %v667
    %v796 = vpack.c.b16 %v676, %v672
    %v797 = vpack.c.b16 %v677, %v673
    %v798 = vpack.c.b16 %v678, %v674
    %v799 = vpack.c.b16 %v679, %v675
    %v800 = vpack.c.b16 %v684, %v680
    %v801 = vpack.c.b16 %v685, %v681
    %v802 = vpack.c.b16 %v686, %v682
    %v803 = vpack.c.b16 %v687, %v683
    %v804 = vpack.c.b16 %v692, %v688
    %v805 = vpack.c.b16 %v693, %v689
    %v806 = vpack.c.b16 %v694, %v690
    %v807 = vpack.c.b16 %v695, %v691
    %v808 = vpack.c.b16 %v700, %v696
    %v809 = vpack.c.b16 %v701, %v697
    %v810 = vpack.c.b16 %v702, %v698
    %v811 = vpack.c.b16 %v703, %v699
    %v812 = vpack.c.b16 %v708, %v704
    %v813 = vpack.c.b16 %v709, %v705
    %v814 = vpack.c.b16 %v710, %v706
    %v815 = vpack.c.b16 %v711, %v707
    %v816 = vpack.c.b16 %v716, %v712
    %v817 = vpack.c.b16 %v717, %v713
    %v818 = vpack.c.b16 %v718, %v714
    %v819 = vpack.c.b16 %v719, %v715
    %v820 = vpack.c.b16 %v724, %v720
    %v821 = vpack.c.b16 %v725, %v721
    %v822 = vpack.c.b16 %v726, %v722
    %v823 = vpack.c.b16 %v727, %v723
    %v824 = vpack.c.b16 %v732, %v728
    %v825 = vpack.c.b16 %v733, %v729
    %v826 = vpack.c.b16 %v734, %v730
    %v827 = vpack.c.b16 %v735, %v731
    %v828 = vpack.c.b16 %v740, %v736
    %v829 = vpack.c.b16 %v741, %v737
    %v830 = vpack.c.b16 %v742, %v738
    %v831 = vpack.c.b16 %v743, %v739
    %v832 = vpack.c.b16 %v748, %v744
    %v833 = vpack.c.b16 %v749, %v745
    %v834 = vpack.c.b16 %v750, %v746
    %v835 = vpack.c.b16 %v751, %v747
    %v836 = vpack.c.b16 %v756, %v752
    %v837 = vpack.c.b16 %v757, %v753
    %v838 = vpack.c.b16 %v758, %v754
    %v839 = vpack.c.b16 %v759, %v755
    %v840 = vpack.c.b16 %v764, %v760
    %v841 = vpack.c.b16 %v765, %v761
    %v842 = vpack.c.b16 %v766, %v762
    %v843 = vpack.c.b16 %v767, %v763
    %v844 = vpack.c.b16 %v772, %v768
    %v845 = vpack.c.b16 %v773, %v769
    %v846 = vpack.c.b16 %v774, %v770
    %v847 = vpack.c.b16 %v775, %v771
    %v848 = vpack.c.b16 %v780, %v776
    %v849 = vpack.c.b16 %v781, %v777
    %v850 = vpack.c.b16 %v782, %v778
    %v851 = vpack.c.b16 %v783, %v779
    %v852 = vpack.c.b16 %v788, %v784
    %v853 = vpack.c.b16 %v789, %v785
    %v854 = vpack.c.b16 %v790, %v786
    %v855 = vpack.c.b16 %v791, %v787
    %920 = vmatprep.subr.bf16.mxu0 %v821
    %921 = vmatpush1.bf16.msra.mxu0 %v820
    %922 = vmatprep.subr.bf16.mxu0 %v817
    %923 = vmatpush1.bf16.msra.mxu0 %v816
    %924 = vmatprep.subr.bf16.mxu0 %v813
    %925 = vmatpush1.bf16.msra.mxu0 %v812
    %926 = vmatprep.subr.bf16.mxu0 %v809
    %927 = vmatpush1.bf16.msra.mxu0 %v808
    %928 = vmatprep.subr.bf16.mxu0 %v805
    %929 = vmatpush1.bf16.msra.mxu0 %v804
    %930 = vmatprep.subr.bf16.mxu0 %v801
    %931 = vmatpush1.bf16.msra.mxu0 %v800
    %932 = vmatprep.subr.bf16.mxu0 %v797
    %933 = vmatpush1.bf16.msra.mxu0 %v796
    %934 = vmatprep.subr.bf16.mxu0 %v793
    %935 = vmatpush1.bf16.msra.mxu0 %v792
    %936 = vmatprep.subr.bf16.mxu0 %v853
    %937 = vmatpush2.bf16.msra.mxu0 %v852
    %938 = vmatprep.subr.bf16.mxu0 %v849
    %939 = vmatpush2.bf16.msra.mxu0 %v848
    %940 = vmatprep.subr.bf16.mxu0 %v845
    %941 = vmatpush2.bf16.msra.mxu0 %v844
    %942 = vmatprep.subr.bf16.mxu0 %v841
    %943 = vmatpush2.bf16.msra.mxu0 %v840
    %944 = vmatprep.subr.bf16.mxu0 %v837
    %945 = vmatpush2.bf16.msra.mxu0 %v836
    %946 = vmatprep.subr.bf16.mxu0 %v833
    %947 = vmatpush2.bf16.msra.mxu0 %v832
    %948 = vmatprep.subr.bf16.mxu0 %v829
    %949 = vmatpush2.bf16.msra.mxu0 %v828
    %950 = vmatprep.subr.bf16.mxu0 %v825
    %951 = vmatpush2.bf16.msra.mxu0 %v824
    %952 = vmatprep.mubr.bf16.mxu0 %v513
    %953 = vmatmul.mubr.bf16.gmra.mxu0 %v512
    %v954 = vpop.f32.mrf.mxu0
    %v955 = vadd.f32 %v583, %v954
    %v956 = vpop.f32.mrf.mxu0
    %v957 = vadd.f32 %v587, %v956
    %v958 = vpop.f32.mrf.mxu0
    %v959 = vpop.f32.mrf.mxu0
    %960 = vdwg.mxu0
    %961 = vmatprep.subr.bf16.mxu0 %v823
    %962 = vmatpush1.bf16.msra.mxu0 %v822
    %963 = vmatprep.subr.bf16.mxu0 %v819
    %964 = vmatpush1.bf16.msra.mxu0 %v818
    %965 = vmatprep.subr.bf16.mxu0 %v815
    %966 = vmatpush1.bf16.msra.mxu0 %v814
    %967 = vmatprep.subr.bf16.mxu0 %v811
    %968 = vmatpush1.bf16.msra.mxu0 %v810
    %969 = vmatprep.subr.bf16.mxu0 %v807
    %970 = vmatpush1.bf16.msra.mxu0 %v806
    %971 = vmatprep.subr.bf16.mxu0 %v803
    %972 = vmatpush1.bf16.msra.mxu0 %v802
    %973 = vmatprep.subr.bf16.mxu0 %v799
    %974 = vmatpush1.bf16.msra.mxu0 %v798
    %975 = vmatprep.subr.bf16.mxu0 %v795
    %976 = vmatpush1.bf16.msra.mxu0 %v794
    %977 = vmatprep.subr.bf16.mxu0 %v855
    %978 = vmatpush2.bf16.msra.mxu0 %v854
    %979 = vmatprep.subr.bf16.mxu0 %v851
    %980 = vmatpush2.bf16.msra.mxu0 %v850
    %981 = vmatprep.subr.bf16.mxu0 %v847
    %982 = vmatpush2.bf16.msra.mxu0 %v846
    %983 = vmatprep.subr.bf16.mxu0 %v843
    %984 = vmatpush2.bf16.msra.mxu0 %v842
    %985 = vmatprep.subr.bf16.mxu0 %v839
    %986 = vmatpush2.bf16.msra.mxu0 %v838
    %987 = vmatprep.subr.bf16.mxu0 %v835
    %988 = vmatpush2.bf16.msra.mxu0 %v834
    %989 = vmatprep.subr.bf16.mxu0 %v831
    %990 = vmatpush2.bf16.msra.mxu0 %v830
    %991 = vmatprep.subr.bf16.mxu0 %v827
    %992 = vmatpush2.bf16.msra.mxu0 %v826
    %993 = vmatprep.mubr.bf16.mxu0 %v513
    %994 = vmatmul.mubr.bf16.gmra.mxu0 %v512
    %v995 = vpop.f32.mrf.mxu0
    %v996 = vadd.f32 %v591, %v995
    %v997 = vpop.f32.mrf.mxu0
    %v998 = vadd.f32 %v595, %v997
    %v999 = vpop.f32.mrf.mxu0
    %v1000 = vpop.f32.mrf.mxu0
    %1001 = vdwg.mxu0
    %v1002 = vxor.u32 %v955, 2147483648
    %v1003 = vxor.u32 %v957, 2147483648
    %v1004 = vxor.u32 %v996, 2147483648
    %v1005 = vxor.u32 %v998, 2147483648
    %v1006 = vmul.f32 %v1002, 1.442695
    %v1007 = vpow.pop %v1006
    %v1008 = vmul.f32 %v1003, 1.442695
    %v1009 = vpow.pop %v1008
    %v1010 = vmul.f32 %v1004, 1.442695
    %v1011 = vpow.pop %v1010
    %v1012 = vmul.f32 %v1005, 1.442695
    %v1013 = vpow.pop %v1012
    %v1014 = vadd.f32 %v1007, 1.0
    %v1015 = vadd.f32 %v1009, 1.0
    %v1016 = vadd.f32 %v1011, 1.0
    %v1017 = vadd.f32 %v1013, 1.0
    %v1018 = vrcp.pop %v1014
    %v1019 = vmul.f32 1.0, %v1018
    %v1020 = vrcp.pop %v1015
    %v1021 = vmul.f32 1.0, %v1020
    %v1022 = vrcp.pop %v1016
    %v1023 = vmul.f32 1.0, %v1022
    %v1024 = vrcp.pop %v1017
    %v1025 = vmul.f32 1.0, %v1024
    %1026 = vst [vmem:[#allocation11] sm:$0xff] %v1019
    %1027 = vst [vmem:[#allocation11 + $0x8] sm:$0xff] %v1021
    %1028 = vst [vmem:[#allocation11 + $0x10] sm:$0xff] %v1023
    %1029 = vst [vmem:[#allocation11 + $0x18] sm:$0xff] %v1025
    // Predicated region
    $region58: #{decoder_decode.1} parent=1 // pred_check
      _
    $region59: #{decoder_decode.1} parent=1 // pred_check_branch
      %1031 = sbr.rel (0) target = $region61
    $region60: #{decoder_decode.1} parent=1 // pred_region
      %s1033 = ssub.s32 512, 512
      %1034 = vsyncadd [#allocation7], %s1033
      %s1036 = sshll.u32 [#allocation11], 4
      %s1037 = int_to_ptr.vmem [resolvable:$true] %s1036
      %1039 = dma.vmem_to_hbm [thread:$0]  %s1037, 512, %s11, [#allocation7]
    $region61: #{decoder_decode.1} parent=1 // pred_fallthru
      _
    // Predicated region
    $region62: #{decoder_decode.1} parent=1 // pred_check
      _
    $region63: #{decoder_decode.1} parent=1 // pred_check_branch
      %1041 = sbr.rel (0) target = $region65
    $region64: #{decoder_decode.1} parent=1 // pred_region
      %1042 = dma.done [#allocation7], 512
    $region65: #{decoder_decode.1} parent=1 // pred_fallthru
      _
    %1043 = vsyncpa [#allocation6], 1
    %1044 = vsyncpa [#allocation9], 1
    %1045 = vsyncpa [#allocation7], 1
  %1046 = vsyncmov [#allocation4]
  %s1047 = vpop.sfrf %1046
  %p1048 = scmp.eq.s32.totalorder %s1047, 0
  %p1049 = pneg %p1048
  %1051 = shalt.err (%p1049)
  %s1052 = scalar_lea.sflag [#allocation4], 1
  %1053 = vsyncmov %s1052
  %s1054 = vpop.sfrf %1053
  %p1055 = scmp.eq.s32.totalorder %s1054, 0
  %p1056 = pneg %p1055
  %1058 = shalt.err (%p1056)

</llo_original>
